<compile_context>
chip_gen: v6e
topology: v6e:2x2x1
jax: 0.10.0
libtpu: 0.0.40
codegen_flags: <defaults>
</compile_context>

<pallas_src>
import jax
import jax.numpy as jnp
from jax.experimental import pallas as pl
from jax.experimental.pallas import tpu as pltpu

NB_BUSINESS = 32   # stand-in for `nb_business` in the original script
H1 = 50
H2 = 10
BATCH = 8

LANE = 128         # every feature dim (32, 50, 10) is zero-padded to one lane group


def sae_kernel(x_ref, w_ref, b_ref, o_ref):
    # One batch tile per grid step; all (padded) weights/biases VMEM-resident.
    # w_ref: (4, 128, 128) stacked [in, out] weights; b_ref: (8, 128) biases
    # in rows 0..3 (rows 4..7 are zero padding for sublane alignment).
    x = x_ref[...]
    h = jax.nn.sigmoid(
        jnp.dot(x, w_ref[0], preferred_element_type=jnp.float32) + b_ref[0:1, :])
    h = jax.nn.sigmoid(
        jnp.dot(h, w_ref[1], preferred_element_type=jnp.float32) + b_ref[1:2, :])
    h = jax.nn.sigmoid(
        jnp.dot(h, w_ref[2], preferred_element_type=jnp.float32) + b_ref[2:3, :])
    y = jnp.dot(h, w_ref[3], preferred_element_type=jnp.float32) + b_ref[3:4, :]
    o_ref[...] = y.astype(o_ref.dtype)


def init_linear(key, in_features, out_features):
    """Deterministic PyTorch-style init: U(-1/sqrt(fan_in), 1/sqrt(fan_in))."""
    k = 1.0 / jnp.sqrt(jnp.float32(in_features))
    kw, kb = jax.random.split(key)
    # PyTorch stores W as [out, in]; keep that convention for the raw params.
    w = jax.random.uniform(kw, (out_features, in_features), jnp.float32, -k, k)
    b = jax.random.uniform(kb, (out_features,), jnp.float32, -k, k)
    return w, b


def _pad_wt(w):
    """[out, in] PyTorch weight -> lane-aligned [128, 128] transposed ([in, out])."""
    wt = w.T
    out = jnp.zeros((LANE, LANE), jnp.float32)
    return out.at[: wt.shape[0], : wt.shape[1]].set(wt)


def _pad_b(b):
    """[out] bias -> lane-aligned [128]."""
    return jnp.zeros((LANE,), jnp.float32).at[: b.shape[0]].set(b)


def prepare_params(params):
    """One-time transpose + zero-pad + stack of all parameters (at init, not per call)."""
    (w1, b1), (w2, b2), (w3, b3), (w4, b4) = params
    w_stack = jnp.stack([_pad_wt(w1), _pad_wt(w2), _pad_wt(w3), _pad_wt(w4)], axis=0)
    b_stack = jnp.zeros((8, LANE), jnp.float32)
    b_stack = b_stack.at[0].set(_pad_b(b1))
    b_stack = b_stack.at[1].set(_pad_b(b2))
    b_stack = b_stack.at[2].set(_pad_b(b3))
    b_stack = b_stack.at[3].set(_pad_b(b4))
    return w_stack, b_stack


def _round_up(x, m):
    return (x + m - 1) // m * m


@jax.jit
def sae_forward(x, padded_params):
    w_stack, b_stack = padded_params
    batch = x.shape[0]
    # Large batch tiles to fill MXU rows; small batches round up to one sublane
    # group (8) and run in a single grid step.
    tb = 128 if batch >= 128 else _round_up(batch, 8)
    padded_batch = _round_up(batch, tb)

    # Zero-pad activations to [padded_batch, 128] (lane-dense input & output).
    x_p = jnp.zeros((padded_batch, LANE), jnp.float32).at[:batch, :NB_BUSINESS].set(x)

    grid = (padded_batch // tb,)
    act_spec = pl.BlockSpec((tb, LANE), lambda i: (i, 0))
    w_spec = pl.BlockSpec((4, LANE, LANE), lambda i: (0, 0, 0))  # resident across tiles
    b_spec = pl.BlockSpec((8, LANE), lambda i: (0, 0))           # resident across tiles

    # Advisory cost estimate (padded shapes).
    flops = 2 * padded_batch * LANE * LANE * 4               # 4 matmuls
    transcendentals = padded_batch * LANE * 3                # exp in 3 sigmoids
    bytes_accessed = (2 * padded_batch * LANE                # x in + y out
                      + 4 * LANE * LANE + 8 * LANE) * 4      # weights + biases

    out = pl.pallas_call(
        sae_kernel,
        out_shape=jax.ShapeDtypeStruct((padded_batch, LANE), jnp.float32),
        grid=grid,
        in_specs=[act_spec, w_spec, b_spec],
        out_specs=act_spec,
        compiler_params=pltpu.CompilerParams(
            dimension_semantics=("parallel",)),
        cost_estimate=pl.CostEstimate(
            flops=flops,
            transcendentals=transcendentals,
            bytes_accessed=bytes_accessed),
    )(x_p, w_stack, b_stack)

    # Drop batch / feature padding.
    return out[:batch, :NB_BUSINESS]


def sae_ref(x, params):
    """Pure-JAX reference (unpadded PyTorch-convention params) for correctness."""
    (w1, b1), (w2, b2), (w3, b3), (w4, b4) = params
    h = jax.nn.sigmoid(x @ w1.T + b1)
    h = jax.nn.sigmoid(h @ w2.T + b2)
    h = jax.nn.sigmoid(h @ w3.T + b3)
    return h @ w4.T + b4


if __name__ == "__main__":
    key = jax.random.PRNGKey(0)
    k_x, k1, k2, k3, k4 = jax.random.split(key, 5)

    params = (
        init_linear(k1, NB_BUSINESS, H1),
        init_linear(k2, H1, H2),
        init_linear(k3, H2, H1),
        init_linear(k4, H1, NB_BUSINESS),
    )
    padded_params = prepare_params(params)   # pad/transpose/stack once at init

    x = jax.random.uniform(k_x, (BATCH, NB_BUSINESS), jnp.float32)

    out = sae_forward(x, padded_params)
    jax.block_until_ready(out)

    ref = sae_ref(x, params)
    assert out.shape == (BATCH, NB_BUSINESS)
    assert jnp.allclose(out, ref, atol=1e-5, rtol=1e-5)

    print("KERNEL_OK")
</pallas_src>

<mosaic_0001>
module attributes {stable_mosaic.version = 11 : i64} {
  func.func @sae_kernel(%arg0: i32, %arg1: memref<8x128xf32, #tpu.memory_space<vmem>>, %arg2: memref<4x128x128xf32, #tpu.memory_space<vmem>>, %arg3: memref<8x128xf32, #tpu.memory_space<vmem>>, %arg4: memref<8x128xf32, #tpu.memory_space<vmem>>) attributes {dimension_semantics = [#tpu.dimension_semantics<parallel>], iteration_bounds = array<i64: 1>, scalar_prefetch = 0 : i64, scratch_operands = 0 : i64, tpu.core_type = #tpu.core_type<tc>, window_params = [{transform_indices = @transform_0, window_bounds = array<i64: 8, 128>}, {pipeline_mode = #tpu.pipeline_mode<synchronous>, transform_indices = @transform_1, window_bounds = array<i64: 4, 128, 128>}, {pipeline_mode = #tpu.pipeline_mode<synchronous>, transform_indices = @transform_2, window_bounds = array<i64: 8, 128>}, {transform_indices = @transform_3, window_bounds = array<i64: 8, 128>}]} {
    %c0 = arith.constant 0 : index
    %c0_0 = arith.constant 0 : index
    %0 = vector.load %arg1[%c0, %c0_0] : memref<8x128xf32, #tpu.memory_space<vmem>>, vector<8x128xf32>
    %c0_1 = arith.constant 0 : index
    %c0_2 = arith.constant 0 : index
    %c0_3 = arith.constant 0 : index
    %1 = vector.load %arg2[%c0_1, %c0_2, %c0_3] : memref<4x128x128xf32, #tpu.memory_space<vmem>>, vector<1x128x128xf32>
    %2 = vector.shape_cast %1 : vector<1x128x128xf32> to vector<128x128xf32>
    %cst = arith.constant dense<0.000000e+00> : vector<8x128xf32>
    %3 = tpu.matmul %0, %2, %cst {dimension_numbers = #tpu.dot_dimension_numbers<[1], [0], [0], [1], [0, 0, 1, 1], [], []>} : vector<8x128xf32>, vector<128x128xf32>, vector<8x128xf32> -> vector<8x128xf32>
    %c0_4 = arith.constant 0 : index
    %c0_5 = arith.constant 0 : index
    %4 = vector.load %arg3[%c0_4, %c0_5] : memref<8x128xf32, #tpu.memory_space<vmem>>, vector<1x128xf32>
    %5 = vector.broadcast %4 : vector<1x128xf32> to vector<8x128xf32>
    %6 = arith.addf %3, %5 : vector<8x128xf32>
    %7 = arith.negf %6 : vector<8x128xf32>
    %8 = math.exp %7 : vector<8x128xf32>
    %cst_6 = arith.constant 1.000000e+00 : f32
    %9 = vector.broadcast %cst_6 : f32 to vector<8x128xf32>
    %10 = arith.addf %9, %8 : vector<8x128xf32>
    %11 = arith.divf %9, %10 : vector<8x128xf32>
    %c1 = arith.constant 1 : index
    %c0_7 = arith.constant 0 : index
    %c0_8 = arith.constant 0 : index
    %12 = vector.load %arg2[%c1, %c0_7, %c0_8] : memref<4x128x128xf32, #tpu.memory_space<vmem>>, vector<1x128x128xf32>
    %13 = vector.shape_cast %12 : vector<1x128x128xf32> to vector<128x128xf32>
    %cst_9 = arith.constant dense<0.000000e+00> : vector<8x128xf32>
    %14 = tpu.matmul %11, %13, %cst_9 {dimension_numbers = #tpu.dot_dimension_numbers<[1], [0], [0], [1], [0, 0, 1, 1], [], []>} : vector<8x128xf32>, vector<128x128xf32>, vector<8x128xf32> -> vector<8x128xf32>
    %c1_10 = arith.constant 1 : index
    %c0_11 = arith.constant 0 : index
    %15 = vector.load %arg3[%c1_10, %c0_11] : memref<8x128xf32, #tpu.memory_space<vmem>>, vector<1x128xf32>
    %16 = vector.broadcast %15 : vector<1x128xf32> to vector<8x128xf32>
    %17 = arith.addf %14, %16 : vector<8x128xf32>
    %18 = arith.negf %17 : vector<8x128xf32>
    %19 = math.exp %18 : vector<8x128xf32>
    %cst_12 = arith.constant 1.000000e+00 : f32
    %20 = vector.broadcast %cst_12 : f32 to vector<8x128xf32>
    %21 = arith.addf %20, %19 : vector<8x128xf32>
    %22 = arith.divf %20, %21 : vector<8x128xf32>
    %c2 = arith.constant 2 : index
    %c0_13 = arith.constant 0 : index
    %c0_14 = arith.constant 0 : index
    %23 = vector.load %arg2[%c2, %c0_13, %c0_14] : memref<4x128x128xf32, #tpu.memory_space<vmem>>, vector<1x128x128xf32>
    %24 = vector.shape_cast %23 : vector<1x128x128xf32> to vector<128x128xf32>
    %cst_15 = arith.constant dense<0.000000e+00> : vector<8x128xf32>
    %25 = tpu.matmul %22, %24, %cst_15 {dimension_numbers = #tpu.dot_dimension_numbers<[1], [0], [0], [1], [0, 0, 1, 1], [], []>} : vector<8x128xf32>, vector<128x128xf32>, vector<8x128xf32> -> vector<8x128xf32>
    %c2_16 = arith.constant 2 : index
    %c0_17 = arith.constant 0 : index
    %26 = vector.load %arg3[%c2_16, %c0_17] : memref<8x128xf32, #tpu.memory_space<vmem>>, vector<1x128xf32>
    %27 = vector.broadcast %26 : vector<1x128xf32> to vector<8x128xf32>
    %28 = arith.addf %25, %27 : vector<8x128xf32>
    %29 = arith.negf %28 : vector<8x128xf32>
    %30 = math.exp %29 : vector<8x128xf32>
    %cst_18 = arith.constant 1.000000e+00 : f32
    %31 = vector.broadcast %cst_18 : f32 to vector<8x128xf32>
    %32 = arith.addf %31, %30 : vector<8x128xf32>
    %33 = arith.divf %31, %32 : vector<8x128xf32>
    %c3 = arith.constant 3 : index
    %c0_19 = arith.constant 0 : index
    %c0_20 = arith.constant 0 : index
    %34 = vector.load %arg2[%c3, %c0_19, %c0_20] : memref<4x128x128xf32, #tpu.memory_space<vmem>>, vector<1x128x128xf32>
    %35 = vector.shape_cast %34 : vector<1x128x128xf32> to vector<128x128xf32>
    %cst_21 = arith.constant dense<0.000000e+00> : vector<8x128xf32>
    %36 = tpu.matmul %33, %35, %cst_21 {dimension_numbers = #tpu.dot_dimension_numbers<[1], [0], [0], [1], [0, 0, 1, 1], [], []>} : vector<8x128xf32>, vector<128x128xf32>, vector<8x128xf32> -> vector<8x128xf32>
    %c3_22 = arith.constant 3 : index
    %c0_23 = arith.constant 0 : index
    %37 = vector.load %arg3[%c3_22, %c0_23] : memref<8x128xf32, #tpu.memory_space<vmem>>, vector<1x128xf32>
    %38 = vector.broadcast %37 : vector<1x128xf32> to vector<8x128xf32>
    %39 = arith.addf %36, %38 : vector<8x128xf32>
    %c0_24 = arith.constant 0 : index
    %c0_25 = arith.constant 0 : index
    %40 = vector.load %arg4[%c0_24, %c0_25] : memref<8x128xf32, #tpu.memory_space<vmem>>, vector<8x128xf32>
    tpu.vector_store %arg4[%c0_24, %c0_25], %39 {strides = array<i32>} : memref<8x128xf32, #tpu.memory_space<vmem>>, vector<8x128xf32>,
    return
  }
  func.func @transform_0(%arg0: i32) -> (i32, i32) {
    %c0_i32 = arith.constant 0 : i32
    %c0_i32_0 = arith.constant 0 : i32
    return %arg0, %c0_i32 : i32, i32
  }
  func.func @transform_1(%arg0: i32) -> (i32, i32, i32) {
    %c0_i32 = arith.constant 0 : i32
    %c0_i32_0 = arith.constant 0 : i32
    %c0_i32_1 = arith.constant 0 : i32
    %c0_i32_2 = arith.constant 0 : i32
    return %c0_i32, %c0_i32_0, %c0_i32_1 : i32, i32, i32
  }
  func.func @transform_2(%arg0: i32) -> (i32, i32) {
    %c0_i32 = arith.constant 0 : i32
    %c0_i32_0 = arith.constant 0 : i32
    %c0_i32_1 = arith.constant 0 : i32
    return %c0_i32, %c0_i32_0 : i32, i32
  }
  func.func @transform_3(%arg0: i32) -> (i32, i32) {
    %c0_i32 = arith.constant 0 : i32
    %c0_i32_0 = arith.constant 0 : i32
    return %arg0, %c0_i32 : i32, i32
  }
}

</mosaic_0001>

<llo_original>
// kernel: sae_forward.1
$region0: #{sae_forward.1}
  #allocation0 [shape = 'u32[]', space=smem, size = 0x4, offset = 0x4, fixed_abs, tag = 'smem constant byte address 0x4 - core index']
  #allocation1 [shape = 'u32[144,128]{1,0:T(1,128)}', space=vmem, size = 0x12000, scoped, tag = 'internal scratch']
  %s0 = inlined_call_operand.vmem [shape: f32[8,128], index: 0, kind: input, shape index: {}]
  %s1 = inlined_call_operand.hbm [shape: f32[4,128,128], index: 1, kind: input, shape index: {}]
  %s2 = inlined_call_operand.vmem [shape: f32[8,128], index: 2, kind: input, shape index: {}]
  %s3 = inlined_call_operand.hbm [shape: f32[8,128], index: 3, kind: output, shape index: {}]
  %s4 = sld [smem:[#allocation0]]
  $region26: #{sae_forward.1} parent=0
    _
  %s6 = ssub.s32 1, %s4
  %s7 = scalar_select 0, %s6, %s4
  $region1: #{sae_forward.1} parent=0
    #allocation2 [shape = 'u8[262144]{0}', space=vmem, size = 0x40000, scoped, tag = 'input window, operand 1, single buffered']
    #allocation3 [shape = 's32[1]{0}', space=sflag, size = 0x4, scoped, tag = 'scoped memory for sae_forward.1']
    #allocation4 [shape = 's32[1]{0}', space=sflag, size = 0x4, scoped, tag = 'scoped memory for sae_forward.1']
    #allocation5 [shape = 'u8[4096]{0}', space=vmem, size = 0x1000, scoped, tag = 'output window, operand 0, single buffered']
    %8 = vsyncpa [#allocation3], 0
    %9 = vsyncpa [#allocation4], 0
    // Predicated region
    $region2: #{sae_forward.1} parent=1 // pred_check
      _
    $region3: #{sae_forward.1} parent=1 // pred_check_branch
      %11 = sbr.rel (0) target = $region5
    $region4: #{sae_forward.1} parent=1 // pred_region
      _
    $region5: #{sae_forward.1} parent=1 // pred_fallthru
      _
    // Predicated region
    $region6: #{sae_forward.1} parent=1 // pred_check
      _
    $region7: #{sae_forward.1} parent=1 // pred_check_branch
      %13 = sbr.rel (0) target = $region9
    $region8: #{sae_forward.1} parent=1 // pred_region
      %s15 = ssub.s32 8192, 8192
      %16 = vsyncadd [#allocation3], %s15
      %s17 = sshll.u32 [#allocation2], 4
      %s18 = int_to_ptr.vmem [resolvable:$true] %s17
      %23 = dma.hbm_to_vmem [thread:$0]  %s1, 8192, %s18, [#allocation3], 128, 128, 8
    $region9: #{sae_forward.1} parent=1 // pred_fallthru
      _
    // Predicated region
    $region10: #{sae_forward.1} parent=1 // pred_check
      _
    $region11: #{sae_forward.1} parent=1 // pred_check_branch
      %25 = sbr.rel (0) target = $region13
    $region12: #{sae_forward.1} parent=1 // pred_region
      _
    $region13: #{sae_forward.1} parent=1 // pred_fallthru
      _
    // Predicated region
    $region14: #{sae_forward.1} parent=1 // pred_check
      _
    $region15: #{sae_forward.1} parent=1 // pred_check_branch
      %27 = sbr.rel (0) target = $region17
    $region16: #{sae_forward.1} parent=1 // pred_region
      %28 = dma.done [#allocation3], 8192
    $region17: #{sae_forward.1} parent=1 // pred_fallthru
      _
    %v29 = vld [vmem:[%s0] sm:$0xff]
    %v30 = vld [vmem:[#allocation2] sm:$0xff]
    %v31 = vld [vmem:[#allocation2 + $0x8] sm:$0xff]
    %v32 = vld [vmem:[#allocation2 + $0x10] sm:$0xff]
    %v33 = vld [vmem:[#allocation2 + $0x18] sm:$0xff]
    %v34 = vld [vmem:[#allocation2 + $0x20] sm:$0xff]
    %v35 = vld [vmem:[#allocation2 + $0x28] sm:$0xff]
    %v36 = vld [vmem:[#allocation2 + $0x30] sm:$0xff]
    %v37 = vld [vmem:[#allocation2 + $0x38] sm:$0xff]
    %v38 = vld [vmem:[#allocation2 + $0x40] sm:$0xff]
    %v39 = vld [vmem:[#allocation2 + $0x48] sm:$0xff]
    %v40 = vld [vmem:[#allocation2 + $0x50] sm:$0xff]
    %v41 = vld [vmem:[#allocation2 + $0x58] sm:$0xff]
    %v42 = vld [vmem:[#allocation2 + $0x60] sm:$0xff]
    %v43 = vld [vmem:[#allocation2 + $0x68] sm:$0xff]
    %v44 = vld [vmem:[#allocation2 + $0x70] sm:$0xff]
    %v45 = vld [vmem:[#allocation2 + $0x78] sm:$0xff]
    %v46 = vld [vmem:[%s2] sm:$0x1]
    %v47 = vlaneseq
    %v48 = vshrl.u32 %v47, 7
    %v49 = vsub.s32 0, %v48
    %v50 = vrot.slane %v46, %v49
    %51 = vmatprep.subr.mxu0 0.0
    %52 = vmatpush1.msra.mxu0 %v45
    %53 = vmatprep.subr.mxu0 0.0
    %54 = vmatpush1.msra.mxu0 %v44
    %55 = vmatprep.subr.mxu0 0.0
    %56 = vmatpush1.msra.mxu0 %v43
    %57 = vmatprep.subr.mxu0 0.0
    %58 = vmatpush1.msra.mxu0 %v42
    %59 = vmatprep.subr.mxu0 0.0
    %60 = vmatpush1.msra.mxu0 %v41
    %61 = vmatprep.subr.mxu0 0.0
    %62 = vmatpush1.msra.mxu0 %v40
    %63 = vmatprep.subr.mxu0 0.0
    %64 = vmatpush1.msra.mxu0 %v39
    %65 = vmatprep.subr.mxu0 0.0
    %66 = vmatpush1.msra.mxu0 %v38
    %67 = vmatprep.subr.mxu0 0.0
    %68 = vmatpush1.msra.mxu0 %v37
    %69 = vmatprep.subr.mxu0 0.0
    %70 = vmatpush1.msra.mxu0 %v36
    %71 = vmatprep.subr.mxu0 0.0
    %72 = vmatpush1.msra.mxu0 %v35
    %73 = vmatprep.subr.mxu0 0.0
    %74 = vmatpush1.msra.mxu0 %v34
    %75 = vmatprep.subr.mxu0 0.0
    %76 = vmatpush1.msra.mxu0 %v33
    %77 = vmatprep.subr.mxu0 0.0
    %78 = vmatpush1.msra.mxu0 %v32
    %79 = vmatprep.subr.mxu0 0.0
    %80 = vmatpush1.msra.mxu0 %v31
    %81 = vmatprep.subr.mxu0 0.0
    %82 = vmatpush1.msra.mxu0 %v30
    %83 = vmatprep.subr.mxu0 0.0
    %84 = vmatpush2.msra.mxu0 0.0
    %85 = vmatprep.subr.mxu0 0.0
    %86 = vmatpush2.msra.mxu0 0.0
    %87 = vmatprep.subr.mxu0 0.0
    %88 = vmatpush2.msra.mxu0 0.0
    %89 = vmatprep.subr.mxu0 0.0
    %90 = vmatpush2.msra.mxu0 0.0
    %91 = vmatprep.subr.mxu0 0.0
    %92 = vmatpush2.msra.mxu0 0.0
    %93 = vmatprep.subr.mxu0 0.0
    %94 = vmatpush2.msra.mxu0 0.0
    %95 = vmatprep.subr.mxu0 0.0
    %96 = vmatpush2.msra.mxu0 0.0
    %97 = vmatprep.subr.mxu0 0.0
    %98 = vmatpush2.msra.mxu0 0.0
    %99 = vmatprep.subr.mxu0 0.0
    %100 = vmatpush2.msra.mxu0 0.0
    %101 = vmatprep.subr.mxu0 0.0
    %102 = vmatpush2.msra.mxu0 0.0
    %103 = vmatprep.subr.mxu0 0.0
    %104 = vmatpush2.msra.mxu0 0.0
    %105 = vmatprep.subr.mxu0 0.0
    %106 = vmatpush2.msra.mxu0 0.0
    %107 = vmatprep.subr.mxu0 0.0
    %108 = vmatpush2.msra.mxu0 0.0
    %109 = vmatprep.subr.mxu0 0.0
    %110 = vmatpush2.msra.mxu0 0.0
    %111 = vmatprep.subr.mxu0 0.0
    %112 = vmatpush2.msra.mxu0 0.0
    %113 = vmatprep.subr.mxu0 0.0
    %114 = vmatpush2.msra.mxu0 0.0
    %115 = vmatprep.mubr.f32.mxu0 0.0
    %116 = vmatmul.mubr.f32.gmra.mxu0 %v29
    %v117 = vpop.f32.mrf.mxu0
    %v118 = vadd.f32 %v50, %v117
    %v119 = vpop.f32.mrf.mxu0
    %120 = vdwg.mxu0
    %v121 = vxor.u32 %v118, 2147483648
    %v122 = vmul.f32 %v121, 1.442695
    %v123 = vpow.pop %v122
    %v124 = vadd.f32 %v123, 1.0
    %v125 = vrcp.pop %v124
    %v126 = vmul.f32 1.0, %v125
    %s127 = scalar_lea.vmem [#allocation2], 128
    %v128 = vld [vmem:[%s127] sm:$0xff]
    %v129 = vld [vmem:[%s127 + $0x8] sm:$0xff]
    %v130 = vld [vmem:[%s127 + $0x10] sm:$0xff]
    %v131 = vld [vmem:[%s127 + $0x18] sm:$0xff]
    %v132 = vld [vmem:[%s127 + $0x20] sm:$0xff]
    %v133 = vld [vmem:[%s127 + $0x28] sm:$0xff]
    %v134 = vld [vmem:[%s127 + $0x30] sm:$0xff]
    %v135 = vld [vmem:[%s127 + $0x38] sm:$0xff]
    %v136 = vld [vmem:[%s127 + $0x40] sm:$0xff]
    %v137 = vld [vmem:[%s127 + $0x48] sm:$0xff]
    %v138 = vld [vmem:[%s127 + $0x50] sm:$0xff]
    %v139 = vld [vmem:[%s127 + $0x58] sm:$0xff]
    %v140 = vld [vmem:[%s127 + $0x60] sm:$0xff]
    %v141 = vld [vmem:[%s127 + $0x68] sm:$0xff]
    %v142 = vld [vmem:[%s127 + $0x70] sm:$0xff]
    %v143 = vld [vmem:[%s127 + $0x78] sm:$0xff]
    %v144 = vld [vmem:[%s2 + $0x1] sm:$0x1]
    %v145 = vlaneseq
    %v146 = vshrl.u32 %v145, 7
    %v147 = vsub.s32 0, %v146
    %v148 = vrot.slane %v144, %v147
    %149 = vmatprep.subr.mxu0 0.0
    %150 = vmatpush1.msra.mxu0 %v143
    %151 = vmatprep.subr.mxu0 0.0
    %152 = vmatpush1.msra.mxu0 %v142
    %153 = vmatprep.subr.mxu0 0.0
    %154 = vmatpush1.msra.mxu0 %v141
    %155 = vmatprep.subr.mxu0 0.0
    %156 = vmatpush1.msra.mxu0 %v140
    %157 = vmatprep.subr.mxu0 0.0
    %158 = vmatpush1.msra.mxu0 %v139
    %159 = vmatprep.subr.mxu0 0.0
    %160 = vmatpush1.msra.mxu0 %v138
    %161 = vmatprep.subr.mxu0 0.0
    %162 = vmatpush1.msra.mxu0 %v137
    %163 = vmatprep.subr.mxu0 0.0
    %164 = vmatpush1.msra.mxu0 %v136
    %165 = vmatprep.subr.mxu0 0.0
    %166 = vmatpush1.msra.mxu0 %v135
    %167 = vmatprep.subr.mxu0 0.0
    %168 = vmatpush1.msra.mxu0 %v134
    %169 = vmatprep.subr.mxu0 0.0
    %170 = vmatpush1.msra.mxu0 %v133
    %171 = vmatprep.subr.mxu0 0.0
    %172 = vmatpush1.msra.mxu0 %v132
    %173 = vmatprep.subr.mxu0 0.0
    %174 = vmatpush1.msra.mxu0 %v131
    %175 = vmatprep.subr.mxu0 0.0
    %176 = vmatpush1.msra.mxu0 %v130
    %177 = vmatprep.subr.mxu0 0.0
    %178 = vmatpush1.msra.mxu0 %v129
    %179 = vmatprep.subr.mxu0 0.0
    %180 = vmatpush1.msra.mxu0 %v128
    %181 = vmatprep.subr.mxu0 0.0
    %182 = vmatpush2.msra.mxu0 0.0
    %183 = vmatprep.subr.mxu0 0.0
    %184 = vmatpush2.msra.mxu0 0.0
    %185 = vmatprep.subr.mxu0 0.0
    %186 = vmatpush2.msra.mxu0 0.0
    %187 = vmatprep.subr.mxu0 0.0
    %188 = vmatpush2.msra.mxu0 0.0
    %189 = vmatprep.subr.mxu0 0.0
    %190 = vmatpush2.msra.mxu0 0.0
    %191 = vmatprep.subr.mxu0 0.0
    %192 = vmatpush2.msra.mxu0 0.0
    %193 = vmatprep.subr.mxu0 0.0
    %194 = vmatpush2.msra.mxu0 0.0
    %195 = vmatprep.subr.mxu0 0.0
    %196 = vmatpush2.msra.mxu0 0.0
    %197 = vmatprep.subr.mxu0 0.0
    %198 = vmatpush2.msra.mxu0 0.0
    %199 = vmatprep.subr.mxu0 0.0
    %200 = vmatpush2.msra.mxu0 0.0
    %201 = vmatprep.subr.mxu0 0.0
    %202 = vmatpush2.msra.mxu0 0.0
    %203 = vmatprep.subr.mxu0 0.0
    %204 = vmatpush2.msra.mxu0 0.0
    %205 = vmatprep.subr.mxu0 0.0
    %206 = vmatpush2.msra.mxu0 0.0
    %207 = vmatprep.subr.mxu0 0.0
    %208 = vmatpush2.msra.mxu0 0.0
    %209 = vmatprep.subr.mxu0 0.0
    %210 = vmatpush2.msra.mxu0 0.0
    %211 = vmatprep.subr.mxu0 0.0
    %212 = vmatpush2.msra.mxu0 0.0
    %213 = vmatprep.mubr.f32.mxu0 0.0
    %214 = vmatmul.mubr.f32.gmra.mxu0 %v126
    %v215 = vpop.f32.mrf.mxu0
    %v216 = vadd.f32 %v148, %v215
    %v217 = vpop.f32.mrf.mxu0
    %218 = vdwg.mxu0
    %v219 = vxor.u32 %v216, 2147483648
    %v220 = vmul.f32 %v219, 1.442695
    %v221 = vpow.pop %v220
    %v222 = vadd.f32 %v221, 1.0
    %v223 = vrcp.pop %v222
    %v224 = vmul.f32 1.0, %v223
    %s225 = scalar_lea.vmem [#allocation2], 256
    %v226 = vld [vmem:[%s225] sm:$0xff]
    %v227 = vld [vmem:[%s225 + $0x8] sm:$0xff]
    %v228 = vld [vmem:[%s225 + $0x10] sm:$0xff]
    %v229 = vld [vmem:[%s225 + $0x18] sm:$0xff]
    %v230 = vld [vmem:[%s225 + $0x20] sm:$0xff]
    %v231 = vld [vmem:[%s225 + $0x28] sm:$0xff]
    %v232 = vld [vmem:[%s225 + $0x30] sm:$0xff]
    %v233 = vld [vmem:[%s225 + $0x38] sm:$0xff]
    %v234 = vld [vmem:[%s225 + $0x40] sm:$0xff]
    %v235 = vld [vmem:[%s225 + $0x48] sm:$0xff]
    %v236 = vld [vmem:[%s225 + $0x50] sm:$0xff]
    %v237 = vld [vmem:[%s225 + $0x58] sm:$0xff]
    %v238 = vld [vmem:[%s225 + $0x60] sm:$0xff]
    %v239 = vld [vmem:[%s225 + $0x68] sm:$0xff]
    %v240 = vld [vmem:[%s225 + $0x70] sm:$0xff]
    %v241 = vld [vmem:[%s225 + $0x78] sm:$0xff]
    %v242 = vld [vmem:[%s2 + $0x2] sm:$0x1]
    %v243 = vlaneseq
    %v244 = vshrl.u32 %v243, 7
    %v245 = vsub.s32 0, %v244
    %v246 = vrot.slane %v242, %v245
    %247 = vmatprep.subr.mxu0 0.0
    %248 = vmatpush1.msra.mxu0 %v241
    %249 = vmatprep.subr.mxu0 0.0
    %250 = vmatpush1.msra.mxu0 %v240
    %251 = vmatprep.subr.mxu0 0.0
    %252 = vmatpush1.msra.mxu0 %v239
    %253 = vmatprep.subr.mxu0 0.0
    %254 = vmatpush1.msra.mxu0 %v238
    %255 = vmatprep.subr.mxu0 0.0
    %256 = vmatpush1.msra.mxu0 %v237
    %257 = vmatprep.subr.mxu0 0.0
    %258 = vmatpush1.msra.mxu0 %v236
    %259 = vmatprep.subr.mxu0 0.0
    %260 = vmatpush1.msra.mxu0 %v235
    %261 = vmatprep.subr.mxu0 0.0
    %262 = vmatpush1.msra.mxu0 %v234
    %263 = vmatprep.subr.mxu0 0.0
    %264 = vmatpush1.msra.mxu0 %v233
    %265 = vmatprep.subr.mxu0 0.0
    %266 = vmatpush1.msra.mxu0 %v232
    %267 = vmatprep.subr.mxu0 0.0
    %268 = vmatpush1.msra.mxu0 %v231
    %269 = vmatprep.subr.mxu0 0.0
    %270 = vmatpush1.msra.mxu0 %v230
    %271 = vmatprep.subr.mxu0 0.0
    %272 = vmatpush1.msra.mxu0 %v229
    %273 = vmatprep.subr.mxu0 0.0
    %274 = vmatpush1.msra.mxu0 %v228
    %275 = vmatprep.subr.mxu0 0.0
    %276 = vmatpush1.msra.mxu0 %v227
    %277 = vmatprep.subr.mxu0 0.0
    %278 = vmatpush1.msra.mxu0 %v226
    %279 = vmatprep.subr.mxu0 0.0
    %280 = vmatpush2.msra.mxu0 0.0
    %281 = vmatprep.subr.mxu0 0.0
    %282 = vmatpush2.msra.mxu0 0.0
    %283 = vmatprep.subr.mxu0 0.0
    %284 = vmatpush2.msra.mxu0 0.0
    %285 = vmatprep.subr.mxu0 0.0
    %286 = vmatpush2.msra.mxu0 0.0
    %287 = vmatprep.subr.mxu0 0.0
    %288 = vmatpush2.msra.mxu0 0.0
    %289 = vmatprep.subr.mxu0 0.0
    %290 = vmatpush2.msra.mxu0 0.0
    %291 = vmatprep.subr.mxu0 0.0
    %292 = vmatpush2.msra.mxu0 0.0
    %293 = vmatprep.subr.mxu0 0.0
    %294 = vmatpush2.msra.mxu0 0.0
    %295 = vmatprep.subr.mxu0 0.0
    %296 = vmatpush2.msra.mxu0 0.0
    %297 = vmatprep.subr.mxu0 0.0
    %298 = vmatpush2.msra.mxu0 0.0
    %299 = vmatprep.subr.mxu0 0.0
    %300 = vmatpush2.msra.mxu0 0.0
    %301 = vmatprep.subr.mxu0 0.0
    %302 = vmatpush2.msra.mxu0 0.0
    %303 = vmatprep.subr.mxu0 0.0
    %304 = vmatpush2.msra.mxu0 0.0
    %305 = vmatprep.subr.mxu0 0.0
    %306 = vmatpush2.msra.mxu0 0.0
    %307 = vmatprep.subr.mxu0 0.0
    %308 = vmatpush2.msra.mxu0 0.0
    %309 = vmatprep.subr.mxu0 0.0
    %310 = vmatpush2.msra.mxu0 0.0
    %311 = vmatprep.mubr.f32.mxu0 0.0
    %312 = vmatmul.mubr.f32.gmra.mxu0 %v224
    %v313 = vpop.f32.mrf.mxu0
    %v314 = vadd.f32 %v246, %v313
    %v315 = vpop.f32.mrf.mxu0
    %316 = vdwg.mxu0
    %v317 = vxor.u32 %v314, 2147483648
    %v318 = vmul.f32 %v317, 1.442695
    %v319 = vpow.pop %v318
    %v320 = vadd.f32 %v319, 1.0
    %v321 = vrcp.pop %v320
    %v322 = vmul.f32 1.0, %v321
    %s323 = scalar_lea.vmem [#allocation2], 384
    %v324 = vld [vmem:[%s323] sm:$0xff]
    %v325 = vld [vmem:[%s323 + $0x8] sm:$0xff]
    %v326 = vld [vmem:[%s323 + $0x10] sm:$0xff]
    %v327 = vld [vmem:[%s323 + $0x18] sm:$0xff]
    %v328 = vld [vmem:[%s323 + $0x20] sm:$0xff]
    %v329 = vld [vmem:[%s323 + $0x28] sm:$0xff]
    %v330 = vld [vmem:[%s323 + $0x30] sm:$0xff]
    %v331 = vld [vmem:[%s323 + $0x38] sm:$0xff]
    %v332 = vld [vmem:[%s323 + $0x40] sm:$0xff]
    %v333 = vld [vmem:[%s323 + $0x48] sm:$0xff]
    %v334 = vld [vmem:[%s323 + $0x50] sm:$0xff]
    %v335 = vld [vmem:[%s323 + $0x58] sm:$0xff]
    %v336 = vld [vmem:[%s323 + $0x60] sm:$0xff]
    %v337 = vld [vmem:[%s323 + $0x68] sm:$0xff]
    %v338 = vld [vmem:[%s323 + $0x70] sm:$0xff]
    %v339 = vld [vmem:[%s323 + $0x78] sm:$0xff]
    %v340 = vld [vmem:[%s2 + $0x3] sm:$0x1]
    %v341 = vlaneseq
    %v342 = vshrl.u32 %v341, 7
    %v343 = vsub.s32 0, %v342
    %v344 = vrot.slane %v340, %v343
    %345 = vmatprep.subr.mxu0 0.0
    %346 = vmatpush1.msra.mxu0 %v339
    %347 = vmatprep.subr.mxu0 0.0
    %348 = vmatpush1.msra.mxu0 %v338
    %349 = vmatprep.subr.mxu0 0.0
    %350 = vmatpush1.msra.mxu0 %v337
    %351 = vmatprep.subr.mxu0 0.0
    %352 = vmatpush1.msra.mxu0 %v336
    %353 = vmatprep.subr.mxu0 0.0
    %354 = vmatpush1.msra.mxu0 %v335
    %355 = vmatprep.subr.mxu0 0.0
    %356 = vmatpush1.msra.mxu0 %v334
    %357 = vmatprep.subr.mxu0 0.0
    %358 = vmatpush1.msra.mxu0 %v333
    %359 = vmatprep.subr.mxu0 0.0
    %360 = vmatpush1.msra.mxu0 %v332
    %361 = vmatprep.subr.mxu0 0.0
    %362 = vmatpush1.msra.mxu0 %v331
    %363 = vmatprep.subr.mxu0 0.0
    %364 = vmatpush1.msra.mxu0 %v330
    %365 = vmatprep.subr.mxu0 0.0
    %366 = vmatpush1.msra.mxu0 %v329
    %367 = vmatprep.subr.mxu0 0.0
    %368 = vmatpush1.msra.mxu0 %v328
    %369 = vmatprep.subr.mxu0 0.0
    %370 = vmatpush1.msra.mxu0 %v327
    %371 = vmatprep.subr.mxu0 0.0
    %372 = vmatpush1.msra.mxu0 %v326
    %373 = vmatprep.subr.mxu0 0.0
    %374 = vmatpush1.msra.mxu0 %v325
    %375 = vmatprep.subr.mxu0 0.0
    %376 = vmatpush1.msra.mxu0 %v324
    %377 = vmatprep.subr.mxu0 0.0
    %378 = vmatpush2.msra.mxu0 0.0
    %379 = vmatprep.subr.mxu0 0.0
    %380 = vmatpush2.msra.mxu0 0.0
    %381 = vmatprep.subr.mxu0 0.0
    %382 = vmatpush2.msra.mxu0 0.0
    %383 = vmatprep.subr.mxu0 0.0
    %384 = vmatpush2.msra.mxu0 0.0
    %385 = vmatprep.subr.mxu0 0.0
    %386 = vmatpush2.msra.mxu0 0.0
    %387 = vmatprep.subr.mxu0 0.0
    %388 = vmatpush2.msra.mxu0 0.0
    %389 = vmatprep.subr.mxu0 0.0
    %390 = vmatpush2.msra.mxu0 0.0
    %391 = vmatprep.subr.mxu0 0.0
    %392 = vmatpush2.msra.mxu0 0.0
    %393 = vmatprep.subr.mxu0 0.0
    %394 = vmatpush2.msra.mxu0 0.0
    %395 = vmatprep.subr.mxu0 0.0
    %396 = vmatpush2.msra.mxu0 0.0
    %397 = vmatprep.subr.mxu0 0.0
    %398 = vmatpush2.msra.mxu0 0.0
    %399 = vmatprep.subr.mxu0 0.0
    %400 = vmatpush2.msra.mxu0 0.0
    %401 = vmatprep.subr.mxu0 0.0
    %402 = vmatpush2.msra.mxu0 0.0
    %403 = vmatprep.subr.mxu0 0.0
    %404 = vmatpush2.msra.mxu0 0.0
    %405 = vmatprep.subr.mxu0 0.0
    %406 = vmatpush2.msra.mxu0 0.0
    %407 = vmatprep.subr.mxu0 0.0
    %408 = vmatpush2.msra.mxu0 0.0
    %409 = vmatprep.mubr.f32.mxu0 0.0
    %410 = vmatmul.mubr.f32.gmra.mxu0 %v322
    %v411 = vpop.f32.mrf.mxu0
    %v412 = vadd.f32 %v344, %v411
    %v413 = vpop.f32.mrf.mxu0
    %414 = vdwg.mxu0
    %415 = vst [vmem:[#allocation5] sm:$0xff] %v412
    // Predicated region
    $region18: #{sae_forward.1} parent=1 // pred_check
      _
    $region19: #{sae_forward.1} parent=1 // pred_check_branch
      %417 = sbr.rel (0) target = $region21
    $region20: #{sae_forward.1} parent=1 // pred_region
      %s419 = ssub.s32 128, 128
      %420 = vsyncadd [#allocation4], %s419
      %s422 = sshll.u32 [#allocation5], 4
      %s423 = int_to_ptr.vmem [resolvable:$true] %s422
      %425 = dma.vmem_to_hbm [thread:$0]  %s423, 128, %s3, [#allocation4]
    $region21: #{sae_forward.1} parent=1 // pred_fallthru
      _
    // Predicated region
    $region22: #{sae_forward.1} parent=1 // pred_check
      _
    $region23: #{sae_forward.1} parent=1 // pred_check_branch
      %427 = sbr.rel (0) target = $region25
    $region24: #{sae_forward.1} parent=1 // pred_region
      %428 = dma.done [#allocation4], 128
    $region25: #{sae_forward.1} parent=1 // pred_fallthru
      _
    %429 = vsyncpa [#allocation3], 1
    %430 = vsyncpa [#allocation4], 1

</llo_original>
